<compile_context>
chip_gen: v5e
topology: v5e:2x2
jax: 0.10.0
libtpu: 0.0.40
codegen_flags: <defaults>
</compile_context>

<pallas_src>
import jax
import jax.numpy as jnp
from jax.experimental import pallas as pl
from jax.experimental.pallas import tpu as pltpu


_CHUNK = 2048  # in-kernel spatial chunk (lanes); multiple of 128


def _outconv_kernel(w_ref, b_ref, x_ref, o_ref):
    """1x1 conv on a lane-dense spatial block, contracted on the VPU.

    w_ref: SMEM (Cout*Cin,) f32   -- weight[co, ci] at index co*Cin + ci
    b_ref: SMEM (Cout,)     f32
    x_ref: VMEM (bn, Cin, t_hw)
    o_ref: VMEM (bn, Cout, t_hw)
    """
    bn, cin, t_hw = x_ref.shape
    cout = o_ref.shape[1]

    # Hoist the SMEM scalars once (loop-invariant sregs).
    wk = [w_ref[k] for k in range(cout * cin)]
    bk = [b_ref[k] for k in range(cout)]

    # Walk the lane axis in bounded chunks so live vregs stay small instead of
    # hoisting the whole (Cin, t_hw) tile into values (which would spill).
    csz = min(_CHUNK, t_hw)
    n_chunks = pl.cdiv(t_hw, csz)
    aligned = (csz % 128 == 0) and (t_hw % csz == 0)

    def chunk_body(j, carry):
        # Clamp so the (possibly partial) last chunk just overlaps the previous
        # one; rewrites are idempotent for this pure elementwise op.
        start = jnp.minimum(j * csz, t_hw - csz)
        if aligned:
            start = pl.multiple_of(start, 128)
        sl = pl.ds(start, csz)
        for bi in range(bn):            # static: bn kept small by the planner
            for co in range(cout):      # static: tiny channel counts
                acc = x_ref[bi, 0:1, sl].astype(jnp.float32) * wk[co * cin] + bk[co]
                for ci in range(1, cin):
                    acc = acc + x_ref[bi, ci:ci + 1, sl].astype(jnp.float32) * wk[co * cin + ci]
                o_ref[bi, co:co + 1, sl] = acc.astype(o_ref.dtype)
        return carry

    jax.lax.fori_loop(0, n_chunks, chunk_body, 0)


def _round_up(v, m):
    return ((v + m - 1) // m) * m


def _round_down(v, m):
    return max(m, (v // m) * m)


def _vmem_budget_bytes():
    """Per-generation VMEM budget for the double-buffered in+out blocks."""
    cap = 64 << 20
    try:
        info = pltpu.get_tpu_info()
        cap = int(getattr(info, "vmem_capacity_bytes", cap))
    except Exception:
        pass
    # Stay well inside the default scoped VMEM limit on every generation
    # (16 MiB on v5e, 32 MiB on v6e/v7x; v7x only has 64 MiB physical VMEM).
    return min(cap // 8, 10 << 20)


def _plan_tiling(N, Cin, Cout, HW, itemsize, *, target_in_bytes=2 << 20,
                 max_bn=16, budget_bytes=None):
    """Pick (bn, t_hw, grid): ~1-2 MiB of input per grid step, double-buffered
    sublane-padded in+out blocks inside the VMEM budget, and >=2 grid steps
    whenever possible (v7x megacore / DMA overlap)."""
    if budget_bytes is None:
        budget_bytes = _vmem_budget_bytes()
    # VMEM blocks pad the second-to-last dim (channels) up to 8 sublanes.
    pad_c = _round_up(Cin, 8) + _round_up(Cout, 8)
    # Largest lane extent whose double-buffered in+out blocks fit the budget.
    max_t_hw = _round_down(budget_bytes // (2 * pad_c * itemsize), _CHUNK)

    if HW <= max_t_hw:
        # Full-extent spatial block (fully contiguous per-(n, c) DMA); grow
        # over batch so each grid step still reaches the target size.
        bn = max(1, min(
            N, max_bn,
            target_in_bytes // max(1, Cin * HW * itemsize),
            budget_bytes // max(1, 2 * pad_c * _round_up(HW, 128) * itemsize)))
        if N > 1 and pl.cdiv(N, bn) < 2:
            bn = pl.cdiv(N, 2)              # keep >= 2 grid steps
        if N == 1 and HW >= 2 * _CHUNK:
            # Single sample: split spatially so the grid still pipelines.
            t_hw = min(max_t_hw, _round_up(pl.cdiv(HW, 2), _CHUNK))
            return 1, t_hw, (1, pl.cdiv(HW, t_hw))
        return bn, HW, (pl.cdiv(N, bn), 1)

    # Large feature map: spatial tiling, ~target_in_bytes of input per step.
    t_hw = min(max_t_hw,
               _round_down(target_in_bytes // max(1, Cin * itemsize), _CHUNK))
    return 1, t_hw, (N, pl.cdiv(HW, t_hw))


def outconv_pallas(x_nchw, weight, bias, *, plan=None):
    """1x1 conv: x_nchw (N, Cin, H, W), weight (Cout, Cin, 1, 1), bias (Cout,)."""
    N, Cin, H, W = x_nchw.shape
    Cout = weight.shape[0]
    HW = H * W
    itemsize = jnp.dtype(x_nchw.dtype).itemsize

    # Free reshapes (no transpose): spatial stays contiguous / lane-major.
    x3 = x_nchw.reshape(N, Cin, HW)
    w_flat = weight.reshape(Cout * Cin).astype(jnp.float32)   # SMEM scalars
    b_flat = bias.reshape(Cout).astype(jnp.float32)           # SMEM scalars

    if plan is None:
        bn, t_hw, grid = _plan_tiling(N, Cin, Cout, HW, itemsize)
    else:
        bn, t_hw, grid = plan

    out3 = pl.pallas_call(
        _outconv_kernel,
        out_shape=jax.ShapeDtypeStruct((N, Cout, HW), x_nchw.dtype),
        grid_spec=pl.GridSpec(
            grid=grid,
            in_specs=[
                pl.BlockSpec(memory_space=pltpu.MemorySpace.SMEM),   # weights
                pl.BlockSpec(memory_space=pltpu.MemorySpace.SMEM),   # bias
                pl.BlockSpec((bn, Cin, t_hw), lambda i, j: (i, 0, j)),
            ],
            out_specs=pl.BlockSpec((bn, Cout, t_hw), lambda i, j: (i, 0, j)),
        ),
        compiler_params=pltpu.CompilerParams(
            dimension_semantics=("parallel", "parallel"),
        ),
    )(w_flat, b_flat, x3)

    return out3.reshape(N, Cout, H, W)


def outconv_reference(x_nchw, weight, bias):
    # Pure-JAX reference for the 1x1 conv (NCHW).
    w = weight.reshape(weight.shape[0], weight.shape[1])  # (Cout, Cin)
    y = jnp.einsum("nchw,oc->nohw", x_nchw, w)
    return y + bias[None, :, None, None]


if __name__ == "__main__":
    # Shapes consistent with the module: in_channels=4, out_channels=3.
    N, Cin, H, W = 2, 4, 16, 16
    Cout = 3

    key = jax.random.PRNGKey(0)
    kx, kw, kb, k2, k3 = jax.random.split(key, 5)

    x = jax.random.normal(kx, (N, Cin, H, W), dtype=jnp.float32)
    # Deterministic param init (shapes from nn.Conv2d(in, out, kernel_size=1)).
    fan_in = Cin * 1 * 1
    bound = 1.0 / (fan_in ** 0.5)
    weight = jax.random.uniform(kw, (Cout, Cin, 1, 1), jnp.float32, -bound, bound)
    bias = jax.random.uniform(kb, (Cout,), jnp.float32, -bound, bound)

    # 1) Default (auto-planned) path on the small test shape.
    out = jax.block_until_ready(outconv_pallas(x, weight, bias))
    ref = outconv_reference(x, weight, bias)
    assert out.shape == (N, Cout, H, W)
    assert jnp.allclose(out, ref, atol=1e-5, rtol=1e-5)

    # 2) Forced small spatial tile with a masked cdiv tail (HW not a multiple
    #    of 128) -- exercises the spatially-tiled / OOB-tail path.
    x2 = jax.random.normal(k2, (2, Cin, 16, 17), dtype=jnp.float32)
    hw2 = 16 * 17
    out2 = jax.block_until_ready(
        outconv_pallas(x2, weight, bias, plan=(1, 128, (2, pl.cdiv(hw2, 128)))))
    ref2 = outconv_reference(x2, weight, bias)
    assert jnp.allclose(out2, ref2, atol=1e-5, rtol=1e-5)

    # 3) Larger feature map -- exercises the multi-chunk in-kernel loop.
    x3 = jax.random.normal(k3, (2, Cin, 64, 64), dtype=jnp.float32)
    out3 = jax.block_until_ready(outconv_pallas(x3, weight, bias))
    ref3 = outconv_reference(x3, weight, bias)
    assert jnp.allclose(out3, ref3, atol=1e-5, rtol=1e-5)

    print("KERNEL_OK")
</pallas_src>

<mosaic_0001>
module attributes {stable_mosaic.version = 11 : i64} {
  func.func @_outconv_kernel(%arg0: i32, %arg1: i32, %arg2: memref<12xf32, #tpu.memory_space<smem>>, %arg3: memref<3xf32, #tpu.memory_space<smem>>, %arg4: memref<1x4x256xf32, #tpu.memory_space<vmem>>, %arg5: memref<1x3x256xf32, #tpu.memory_space<vmem>>) attributes {dimension_semantics = [#tpu.dimension_semantics<parallel>, #tpu.dimension_semantics<parallel>], iteration_bounds = array<i64: 2, 1>, scalar_prefetch = 0 : i64, scratch_operands = 0 : i64, tpu.core_type = #tpu.core_type<tc>, window_params = [{transform_indices = @transform_0, window_bounds = array<i64: 12>}, {transform_indices = @transform_1, window_bounds = array<i64: 3>}, {transform_indices = @transform_2, window_bounds = array<i64: 1, 4, 256>}, {transform_indices = @transform_3, window_bounds = array<i64: 1, 3, 256>}]} {
    %c0 = arith.constant 0 : index
    %0 = memref.load %arg2[%c0] : memref<12xf32, #tpu.memory_space<smem>>
    %c1 = arith.constant 1 : index
    %1 = memref.load %arg2[%c1] : memref<12xf32, #tpu.memory_space<smem>>
    %c2 = arith.constant 2 : index
    %2 = memref.load %arg2[%c2] : memref<12xf32, #tpu.memory_space<smem>>
    %c3 = arith.constant 3 : index
    %3 = memref.load %arg2[%c3] : memref<12xf32, #tpu.memory_space<smem>>
    %c4 = arith.constant 4 : index
    %4 = memref.load %arg2[%c4] : memref<12xf32, #tpu.memory_space<smem>>
    %c5 = arith.constant 5 : index
    %5 = memref.load %arg2[%c5] : memref<12xf32, #tpu.memory_space<smem>>
    %c6 = arith.constant 6 : index
    %6 = memref.load %arg2[%c6] : memref<12xf32, #tpu.memory_space<smem>>
    %c7 = arith.constant 7 : index
    %7 = memref.load %arg2[%c7] : memref<12xf32, #tpu.memory_space<smem>>
    %c8 = arith.constant 8 : index
    %8 = memref.load %arg2[%c8] : memref<12xf32, #tpu.memory_space<smem>>
    %c9 = arith.constant 9 : index
    %9 = memref.load %arg2[%c9] : memref<12xf32, #tpu.memory_space<smem>>
    %c10 = arith.constant 10 : index
    %10 = memref.load %arg2[%c10] : memref<12xf32, #tpu.memory_space<smem>>
    %c11 = arith.constant 11 : index
    %11 = memref.load %arg2[%c11] : memref<12xf32, #tpu.memory_space<smem>>
    %c0_0 = arith.constant 0 : index
    %12 = memref.load %arg3[%c0_0] : memref<3xf32, #tpu.memory_space<smem>>
    %c1_1 = arith.constant 1 : index
    %13 = memref.load %arg3[%c1_1] : memref<3xf32, #tpu.memory_space<smem>>
    %c2_2 = arith.constant 2 : index
    %14 = memref.load %arg3[%c2_2] : memref<3xf32, #tpu.memory_space<smem>>
    %c0_i32 = arith.constant 0 : i32
    %c256_i32 = arith.constant 256 : i32
    %15 = arith.muli %c0_i32, %c256_i32 : i32
    %c0_i32_3 = arith.constant 0 : i32
    %16 = arith.minsi %15, %c0_i32_3 : i32
    %17 = tpu.assume_multiple %16, 128 : i32
    %c0_4 = arith.constant 0 : index
    %c0_5 = arith.constant 0 : index
    %18 = arith.index_cast %17 : i32 to index
    %19 = vector.load %arg4[%c0_4, %c0_5, %18] : memref<1x4x256xf32, #tpu.memory_space<vmem>>, vector<1x1x256xf32>
    %20 = vector.shape_cast %19 : vector<1x1x256xf32> to vector<1x256xf32>
    %21 = vector.broadcast %0 : f32 to vector<1x256xf32>
    %22 = arith.mulf %20, %21 : vector<1x256xf32>
    %23 = vector.broadcast %12 : f32 to vector<1x256xf32>
    %24 = arith.addf %22, %23 : vector<1x256xf32>
    %c0_6 = arith.constant 0 : index
    %c1_7 = arith.constant 1 : index
    %25 = arith.index_cast %17 : i32 to index
    %26 = vector.load %arg4[%c0_6, %c1_7, %25] : memref<1x4x256xf32, #tpu.memory_space<vmem>>, vector<1x1x256xf32>
    %27 = vector.shape_cast %26 : vector<1x1x256xf32> to vector<1x256xf32>
    %28 = vector.broadcast %1 : f32 to vector<1x256xf32>
    %29 = arith.mulf %27, %28 : vector<1x256xf32>
    %30 = arith.addf %24, %29 : vector<1x256xf32>
    %c0_8 = arith.constant 0 : index
    %c2_9 = arith.constant 2 : index
    %31 = arith.index_cast %17 : i32 to index
    %32 = vector.load %arg4[%c0_8, %c2_9, %31] : memref<1x4x256xf32, #tpu.memory_space<vmem>>, vector<1x1x256xf32>
    %33 = vector.shape_cast %32 : vector<1x1x256xf32> to vector<1x256xf32>
    %34 = vector.broadcast %2 : f32 to vector<1x256xf32>
    %35 = arith.mulf %33, %34 : vector<1x256xf32>
    %36 = arith.addf %30, %35 : vector<1x256xf32>
    %c0_10 = arith.constant 0 : index
    %c3_11 = arith.constant 3 : index
    %37 = arith.index_cast %17 : i32 to index
    %38 = vector.load %arg4[%c0_10, %c3_11, %37] : memref<1x4x256xf32, #tpu.memory_space<vmem>>, vector<1x1x256xf32>
    %39 = vector.shape_cast %38 : vector<1x1x256xf32> to vector<1x256xf32>
    %40 = vector.broadcast %3 : f32 to vector<1x256xf32>
    %41 = arith.mulf %39, %40 : vector<1x256xf32>
    %42 = arith.addf %36, %41 : vector<1x256xf32>
    %c0_12 = arith.constant 0 : index
    %c0_13 = arith.constant 0 : index
    %43 = arith.index_cast %17 : i32 to index
    %44 = vector.load %arg5[%c0_12, %c0_13, %43] : memref<1x3x256xf32, #tpu.memory_space<vmem>>, vector<1x1x256xf32>
    %45 = vector.shape_cast %44 : vector<1x1x256xf32> to vector<1x256xf32>
    %46 = vector.shape_cast %42 : vector<1x256xf32> to vector<1x1x256xf32>
    tpu.vector_store %arg5[%c0_12, %c0_13, %43], %46 {strides = array<i32>} : memref<1x3x256xf32, #tpu.memory_space<vmem>>, vector<1x1x256xf32>,
    %c0_14 = arith.constant 0 : index
    %c0_15 = arith.constant 0 : index
    %47 = arith.index_cast %17 : i32 to index
    %48 = vector.load %arg4[%c0_14, %c0_15, %47] : memref<1x4x256xf32, #tpu.memory_space<vmem>>, vector<1x1x256xf32>
    %49 = vector.shape_cast %48 : vector<1x1x256xf32> to vector<1x256xf32>
    %50 = vector.broadcast %4 : f32 to vector<1x256xf32>
    %51 = arith.mulf %49, %50 : vector<1x256xf32>
    %52 = vector.broadcast %13 : f32 to vector<1x256xf32>
    %53 = arith.addf %51, %52 : vector<1x256xf32>
    %c0_16 = arith.constant 0 : index
    %c1_17 = arith.constant 1 : index
    %54 = arith.index_cast %17 : i32 to index
    %55 = vector.load %arg4[%c0_16, %c1_17, %54] : memref<1x4x256xf32, #tpu.memory_space<vmem>>, vector<1x1x256xf32>
    %56 = vector.shape_cast %55 : vector<1x1x256xf32> to vector<1x256xf32>
    %57 = vector.broadcast %5 : f32 to vector<1x256xf32>
    %58 = arith.mulf %56, %57 : vector<1x256xf32>
    %59 = arith.addf %53, %58 : vector<1x256xf32>
    %c0_18 = arith.constant 0 : index
    %c2_19 = arith.constant 2 : index
    %60 = arith.index_cast %17 : i32 to index
    %61 = vector.load %arg4[%c0_18, %c2_19, %60] : memref<1x4x256xf32, #tpu.memory_space<vmem>>, vector<1x1x256xf32>
    %62 = vector.shape_cast %61 : vector<1x1x256xf32> to vector<1x256xf32>
    %63 = vector.broadcast %6 : f32 to vector<1x256xf32>
    %64 = arith.mulf %62, %63 : vector<1x256xf32>
    %65 = arith.addf %59, %64 : vector<1x256xf32>
    %c0_20 = arith.constant 0 : index
    %c3_21 = arith.constant 3 : index
    %66 = arith.index_cast %17 : i32 to index
    %67 = vector.load %arg4[%c0_20, %c3_21, %66] : memref<1x4x256xf32, #tpu.memory_space<vmem>>, vector<1x1x256xf32>
    %68 = vector.shape_cast %67 : vector<1x1x256xf32> to vector<1x256xf32>
    %69 = vector.broadcast %7 : f32 to vector<1x256xf32>
    %70 = arith.mulf %68, %69 : vector<1x256xf32>
    %71 = arith.addf %65, %70 : vector<1x256xf32>
    %c0_22 = arith.constant 0 : index
    %c1_23 = arith.constant 1 : index
    %72 = arith.index_cast %17 : i32 to index
    %73 = vector.load %arg5[%c0_22, %c1_23, %72] : memref<1x3x256xf32, #tpu.memory_space<vmem>>, vector<1x1x256xf32>
    %74 = vector.shape_cast %73 : vector<1x1x256xf32> to vector<1x256xf32>
    %75 = vector.shape_cast %71 : vector<1x256xf32> to vector<1x1x256xf32>
    tpu.vector_store %arg5[%c0_22, %c1_23, %72], %75 {strides = array<i32>} : memref<1x3x256xf32, #tpu.memory_space<vmem>>, vector<1x1x256xf32>,
    %c0_24 = arith.constant 0 : index
    %c0_25 = arith.constant 0 : index
    %76 = arith.index_cast %17 : i32 to index
    %77 = vector.load %arg4[%c0_24, %c0_25, %76] : memref<1x4x256xf32, #tpu.memory_space<vmem>>, vector<1x1x256xf32>
    %78 = vector.shape_cast %77 : vector<1x1x256xf32> to vector<1x256xf32>
    %79 = vector.broadcast %8 : f32 to vector<1x256xf32>
    %80 = arith.mulf %78, %79 : vector<1x256xf32>
    %81 = vector.broadcast %14 : f32 to vector<1x256xf32>
    %82 = arith.addf %80, %81 : vector<1x256xf32>
    %c0_26 = arith.constant 0 : index
    %c1_27 = arith.constant 1 : index
    %83 = arith.index_cast %17 : i32 to index
    %84 = vector.load %arg4[%c0_26, %c1_27, %83] : memref<1x4x256xf32, #tpu.memory_space<vmem>>, vector<1x1x256xf32>
    %85 = vector.shape_cast %84 : vector<1x1x256xf32> to vector<1x256xf32>
    %86 = vector.broadcast %9 : f32 to vector<1x256xf32>
    %87 = arith.mulf %85, %86 : vector<1x256xf32>
    %88 = arith.addf %82, %87 : vector<1x256xf32>
    %c0_28 = arith.constant 0 : index
    %c2_29 = arith.constant 2 : index
    %89 = arith.index_cast %17 : i32 to index
    %90 = vector.load %arg4[%c0_28, %c2_29, %89] : memref<1x4x256xf32, #tpu.memory_space<vmem>>, vector<1x1x256xf32>
    %91 = vector.shape_cast %90 : vector<1x1x256xf32> to vector<1x256xf32>
    %92 = vector.broadcast %10 : f32 to vector<1x256xf32>
    %93 = arith.mulf %91, %92 : vector<1x256xf32>
    %94 = arith.addf %88, %93 : vector<1x256xf32>
    %c0_30 = arith.constant 0 : index
    %c3_31 = arith.constant 3 : index
    %95 = arith.index_cast %17 : i32 to index
    %96 = vector.load %arg4[%c0_30, %c3_31, %95] : memref<1x4x256xf32, #tpu.memory_space<vmem>>, vector<1x1x256xf32>
    %97 = vector.shape_cast %96 : vector<1x1x256xf32> to vector<1x256xf32>
    %98 = vector.broadcast %11 : f32 to vector<1x256xf32>
    %99 = arith.mulf %97, %98 : vector<1x256xf32>
    %100 = arith.addf %94, %99 : vector<1x256xf32>
    %c0_32 = arith.constant 0 : index
    %c2_33 = arith.constant 2 : index
    %101 = arith.index_cast %17 : i32 to index
    %102 = vector.load %arg5[%c0_32, %c2_33, %101] : memref<1x3x256xf32, #tpu.memory_space<vmem>>, vector<1x1x256xf32>
    %103 = vector.shape_cast %102 : vector<1x1x256xf32> to vector<1x256xf32>
    %104 = vector.shape_cast %100 : vector<1x256xf32> to vector<1x1x256xf32>
    tpu.vector_store %arg5[%c0_32, %c2_33, %101], %104 {strides = array<i32>} : memref<1x3x256xf32, #tpu.memory_space<vmem>>, vector<1x1x256xf32>,
    %c1_i32 = arith.constant 1 : i32
    return
  }
  func.func @transform_0(%arg0: i32, %arg1: i32) -> i32 {
    %c0_i32 = arith.constant 0 : i32
    %c0_i32_0 = arith.constant 0 : i32
    return %c0_i32 : i32
  }
  func.func @transform_1(%arg0: i32, %arg1: i32) -> i32 {
    %c0_i32 = arith.constant 0 : i32
    %c0_i32_0 = arith.constant 0 : i32
    return %c0_i32 : i32
  }
  func.func @transform_2(%arg0: i32, %arg1: i32) -> (i32, i32, i32) {
    %c0_i32 = arith.constant 0 : i32
    %c0_i32_0 = arith.constant 0 : i32
    return %arg0, %c0_i32, %arg1 : i32, i32, i32
  }
  func.func @transform_3(%arg0: i32, %arg1: i32) -> (i32, i32, i32) {
    %c0_i32 = arith.constant 0 : i32
    %c0_i32_0 = arith.constant 0 : i32
    return %arg0, %c0_i32, %arg1 : i32, i32, i32
  }
}

</mosaic_0001>

<llo_original>
// kernel: tpu_custom_call.1
$region0: #{tpu_custom_call.1}
  #allocation0 [shape = 'u32[]', space=smem, size = 0x4, offset = 0x4, fixed_abs, tag = 'smem constant byte address 0x4 - core index']
  #allocation1 [shape = 'u32[72,128]{1,0:T(1,128)}', space=vmem, size = 0x9000, scoped, tag = 'internal scratch']
  %s0 = inlined_call_operand.hbm [shape: f32[12], index: 0, kind: input, shape index: {}]
  %s1 = inlined_call_operand.hbm [shape: f32[3], index: 1, kind: input, shape index: {}]
  %s2 = inlined_call_operand.hbm [shape: f32[2,4,256], index: 2, kind: input, shape index: {}]
  %s3 = inlined_call_operand.vmem [shape: f32[2,3,256], index: 3, kind: output, shape index: {}]
  %s4 = sld [smem:[#allocation0]]
  $region57: #{tpu_custom_call.1} parent=0
    _
  %s6 = ssub.s32 1, %s4
  %s7 = scalar_select 0, %s6, %s4
  $region1: #{tpu_custom_call.1} parent=0
    #allocation2 [shape = 'u8[512]{0}', space=smem, size = 0x200, scoped, tag = 'input window, operand 0, single buffered']
    #allocation3 [shape = 's32[2]{0}', space=sflag, size = 0x8, scoped, tag = 'scoped memory for tpu_custom_call.1']
    #allocation4 [shape = 's32[2]{0}', space=sflag, size = 0x8, scoped, tag = 'scoped memory for tpu_custom_call.1']
    #allocation5 [shape = 'u8[512]{0}', space=smem, size = 0x200, scoped, tag = 'input window, operand 1, single buffered']
    #allocation6 [shape = 's32[1]{0}', space=sflag, size = 0x4, scoped, tag = 'scoped memory for tpu_custom_call.1']
    #allocation7 [shape = 'u8[8192]{0}', space=vmem, size = 0x2000, scoped, tag = 'input window, operand 2']
    %8 = vsyncpa [#allocation4], 0
    %9 = vsyncpa [#allocation6], 0
    %10 = vsyncpa [#allocation3], 0
    %s11 = scalar_lea.sflag [#allocation3], 1
    %12 = vsyncpa %s11, 0
    loop: start=0, step=1, limit=4
    $region2: #{tpu_custom_call.1} parent=1 // loop_pre_header
      _
    $region3: #{tpu_custom_call.1} parent=1 // loop_header
      %s14 = sphi 0, %s18
      %p15 = scmp.ge.s32.totalorder %s14, 4
      %s21 = sphi 0, %s33
      %s22 = sphi 0, %s29
      %s23 = sphi 0, %s21
      %s24 = sphi 0, %s22
      %s25 = sphi 0, %s23
      %s26 = sphi 0, %s24
      %s34 = sphi 0, %s34
      %s36 = sphi 0, %s34
      %s37 = sphi 0, %s36
      %s51 = sphi 0, %s37
      %s55 = sphi 0, %s55
      %s57 = sphi 0, %s55
      %s58 = sphi 0, %s57
      %s72 = sphi 0, %s58
      %s80 = sphi 0, %s82
      %s83 = sphi 0, %s80
      %s84 = sphi 0, %s83
      %s100 = sphi 0, %s84
      %s108 = sphi 0, %s110
      %s111 = sphi 0, %s108
      %s112 = sphi 0, %s111
      %s128 = sphi 0, %s112
    $region4: #{tpu_custom_call.1} parent=1 // loop_header_branch
      %17 = sbr.rel (%p15) target = $region8
    $region5: #{tpu_custom_call.1} parent=1 // loop_body
      %s19 = ssub.s32 %s14, 1
      %s20 = ssub.s32 %s14, 2
      %s27 = sadd.s32 1, %s22
      %p28 = scmp.ge.s32.totalorder %s27, 1
      %s29 = scalar_select %p28, 0, %s27
      %s30 = sadd.s32 1, %s21
      %s31 = scalar_select %p28, %s30, %s21
      %p32 = scmp.ge.s32.totalorder %s31, 2
      %s33 = scalar_select %p32, 0, %s31
      %s35 = sadd.s32 %s34, 1
      %p38 = scmp.eq.s32.totalorder %s14, 1
      %p39 = scmp.ne.s32.totalorder %s34, %s36
      %p40 = scmp.eq.s32.totalorder %s14, 0
      %p41 = por %p39, %p40
      %p42 = scmp.ne.s32.totalorder %s34, %s36
      %p43 = scmp.eq.s32.totalorder %s19, 1
      %p44 = por %p42, %p43
      %p45 = scmp.ne.s32.totalorder %s36, %s37
      %p46 = scmp.eq.s32.totalorder %s19, 0
      %p47 = por %p45, %p46
      %p48 = scmp.ne.s32.totalorder %s36, %s37
      %p49 = scmp.eq.s32.totalorder %s20, 1
      %p50 = por %p48, %p49
      %p52 = scmp.ne.s32.totalorder %s37, %s51
      %p53 = scmp.eq.s32.totalorder %s20, 0
      %p54 = por %p52, %p53
      %s56 = sadd.s32 %s55, 1
      %p59 = scmp.eq.s32.totalorder %s14, 1
      %p60 = scmp.ne.s32.totalorder %s55, %s57
      %p61 = scmp.eq.s32.totalorder %s14, 0
      %p62 = por %p60, %p61
      %p63 = scmp.ne.s32.totalorder %s55, %s57
      %p64 = scmp.eq.s32.totalorder %s19, 1
      %p65 = por %p63, %p64
      %p66 = scmp.ne.s32.totalorder %s57, %s58
      %p67 = scmp.eq.s32.totalorder %s19, 0
      %p68 = por %p66, %p67
      %p69 = scmp.ne.s32.totalorder %s57, %s58
      %p70 = scmp.eq.s32.totalorder %s20, 1
      %p71 = por %p69, %p70
      %p73 = scmp.ne.s32.totalorder %s58, %s72
      %p74 = scmp.eq.s32.totalorder %s20, 0
      %p75 = por %p73, %p74
      %s76 = ssub.s32 %s21, %s33
      %s77 = ssub.s32 %s22, %s29
      %s78 = sor.u32 %s76, %s77
      %p79 = scmp.eq.s32.totalorder %s78, 0
      %s81 = sadd.s32 %s80, 1
      %s82 = scalar_select %p79, %s80, %s81
      %p85 = pneg %p79
      %p86 = scmp.eq.s32.totalorder %s14, 1
      %p87 = por %p85, %p86
      %p88 = scmp.ne.s32.totalorder %s80, %s83
      %p89 = scmp.eq.s32.totalorder %s14, 0
      %p90 = por %p88, %p89
      %p91 = scmp.ne.s32.totalorder %s80, %s83
      %p92 = scmp.eq.s32.totalorder %s19, 1
      %p93 = por %p91, %p92
      %p94 = scmp.ne.s32.totalorder %s83, %s84
      %p95 = scmp.eq.s32.totalorder %s19, 0
      %p96 = por %p94, %p95
      %p97 = scmp.ne.s32.totalorder %s83, %s84
      %p98 = scmp.eq.s32.totalorder %s20, 1
      %p99 = por %p97, %p98
      %p101 = scmp.ne.s32.totalorder %s84, %s100
      %p102 = scmp.eq.s32.totalorder %s20, 0
      %p103 = por %p101, %p102
      %s104 = ssub.s32 %s21, %s33
      %s105 = ssub.s32 %s22, %s29
      %s106 = sor.u32 %s104, %s105
      %p107 = scmp.eq.s32.totalorder %s106, 0
      %s109 = sadd.s32 %s108, 1
      %s110 = scalar_select %p107, %s108, %s109
      %p113 = pneg %p107
      %p114 = scmp.eq.s32.totalorder %s14, 1
      %p115 = por %p113, %p114
      %p116 = scmp.ne.s32.totalorder %s108, %s111
      %p117 = scmp.eq.s32.totalorder %s14, 0
      %p118 = por %p116, %p117
      %p119 = scmp.ne.s32.totalorder %s108, %s111
      %p120 = scmp.eq.s32.totalorder %s19, 1
      %p121 = por %p119, %p120
      %p122 = scmp.ne.s32.totalorder %s111, %s112
      %p123 = scmp.eq.s32.totalorder %s19, 0
      %p124 = por %p122, %p123
      %p125 = scmp.ne.s32.totalorder %s111, %s112
      %p126 = scmp.eq.s32.totalorder %s20, 1
      %p127 = por %p125, %p126
      %p129 = scmp.ne.s32.totalorder %s112, %s128
      %p130 = scmp.eq.s32.totalorder %s20, 0
      %p131 = por %p129, %p130
      %p132 = scmp.le.s32.totalorder 1, %s14
      %p133 = scmp.lt.s32.totalorder %s14, 3
      %p134 = pnand %p132, %p133
      %p135 = pneg %p134
      // Predicated region
      $region9: #{tpu_custom_call.1} parent=5 // pred_check
        _
      $region10: #{tpu_custom_call.1} parent=5 // pred_check_branch
        %137 = sbr.rel (%p134) target = $region12
      $region11: #{tpu_custom_call.1} parent=5 // pred_region
        %s138 = ssub.s32 %s14, 1
        // Predicated region
        $region13: #{tpu_custom_call.1} parent=11 // pred_check
          %p139 = pneg %p47
        $region14: #{tpu_custom_call.1} parent=11 // pred_check_branch
          %141 = sbr.rel (%p139) target = $region16
        $region15: #{tpu_custom_call.1} parent=11 // pred_region
          %143 = vsyncadd [#allocation4], 0
          %s145 = sshll.u32 %s0, 4
          %s146 = int_to_ptr.hbm [resolvable:$true] %s145
          %148 = dma.hbm_to_smem %s146, 16, [#allocation2], [#allocation4]
        $region16: #{tpu_custom_call.1} parent=11 // pred_fallthru
          _
        // Predicated region
        $region17: #{tpu_custom_call.1} parent=11 // pred_check
          %p149 = pneg %p68
        $region18: #{tpu_custom_call.1} parent=11 // pred_check_branch
          %151 = sbr.rel (%p149) target = $region20
        $region19: #{tpu_custom_call.1} parent=11 // pred_region
          %153 = vsyncadd [#allocation6], 0
          %s155 = sshll.u32 %s1, 4
          %s156 = int_to_ptr.hbm [resolvable:$true] %s155
          %158 = dma.hbm_to_smem %s156, 16, [#allocation5], [#allocation6]
        $region20: #{tpu_custom_call.1} parent=11 // pred_fallthru
          _
      $region12: #{tpu_custom_call.1} parent=5 // pred_fallthru
        _
      %p159 = scmp.lt.s32.totalorder %s14, 2
      // Predicated region
      $region21: #{tpu_custom_call.1} parent=5 // pred_check
        %p160 = pneg %p159
      $region22: #{tpu_custom_call.1} parent=5 // pred_check_branch
        %162 = sbr.rel (%p160) target = $region24
      $region23: #{tpu_custom_call.1} parent=5 // pred_region
        // Predicated region
        $region25: #{tpu_custom_call.1} parent=23 // pred_check
          %p163 = pneg %p90
        $region26: #{tpu_custom_call.1} parent=23 // pred_check_branch
          %165 = sbr.rel (%p163) target = $region28
        $region27: #{tpu_custom_call.1} parent=23 // pred_region
          %s166 = sand.u32 %s80, 1
          %s167 = scalar_lea.sflag [#allocation3], %s166
          %s168 = sand.u32 %s80, 1
          %s169 = smul.addr %s168, 8
          %s170 = scalar_lea.vmem [#allocation7], %s169
          %s171 = smul.u32 2, %s22
          %173 = vsyncadd %s167, 0
          %s174 = smul.addr %s21, 2
          %s175 = sadd.s32 %s171, %s174
          %s176 = smul.addr %s175, 4
          %s177 = scalar_lea.hbm %s2, %s176
          %s179 = sshll.u32 %s177, 4
          %s180 = int_to_ptr.hbm [resolvable:$true] %s179
          %s181 = sshll.u32 %s170, 4
          %s182 = int_to_ptr.vmem [resolvable:$true] %s181
          %184 = dma.hbm_to_vmem [thread:$0]  %s180, 128, %s182, %s167
        $region28: #{tpu_custom_call.1} parent=23 // pred_fallthru
          _
      $region24: #{tpu_custom_call.1} parent=5 // pred_fallthru
        _
      %p185 = scmp.le.s32.totalorder 1, %s14
      %p186 = scmp.lt.s32.totalorder %s14, 3
      %p187 = pnand %p185, %p186
      %p188 = pneg %p187
      // Predicated region
      $region29: #{tpu_custom_call.1} parent=5 // pred_check
        _
      $region30: #{tpu_custom_call.1} parent=5 // pred_check_branch
        %190 = sbr.rel (%p187) target = $region32
      $region31: #{tpu_custom_call.1} parent=5 // pred_region
        %s191 = ssub.s32 %s14, 1
        // Predicated region
        $region33: #{tpu_custom_call.1} parent=31 // pred_check
          %p192 = pneg %p47
        $region34: #{tpu_custom_call.1} parent=31 // pred_check_branch
          %194 = sbr.rel (%p192) target = $region36
        $region35: #{tpu_custom_call.1} parent=31 // pred_region
          %196 = dma.done [#allocation4], 16
        $region36: #{tpu_custom_call.1} parent=31 // pred_fallthru
          _
        // Predicated region
        $region37: #{tpu_custom_call.1} parent=31 // pred_check
          %p197 = pneg %p68
        $region38: #{tpu_custom_call.1} parent=31 // pred_check_branch
          %199 = sbr.rel (%p197) target = $region40
        $region39: #{tpu_custom_call.1} parent=31 // pred_region
          %201 = dma.done [#allocation6], 16
        $region40: #{tpu_custom_call.1} parent=31 // pred_fallthru
          _
        %s202 = sand.u32 %s83, 1
        %s203 = scalar_lea.sflag [#allocation3], %s202
        %s204 = sand.u32 %s83, 1
        %s205 = smul.addr %s204, 8
        %s206 = scalar_lea.vmem [#allocation7], %s205
        // Predicated region
        $region41: #{tpu_custom_call.1} parent=31 // pred_check
          %p207 = pneg %p96
        $region42: #{tpu_custom_call.1} parent=31 // pred_check_branch
          %209 = sbr.rel (%p207) target = $region44
        $region43: #{tpu_custom_call.1} parent=31 // pred_region
          %211 = dma.done %s203, 128
        $region44: #{tpu_custom_call.1} parent=31 // pred_fallthru
          _
        %212 = sfence
        %p213 = pneg %p47
        %p214 = pneg %p44
        %p215 = pneg %p68
        %p216 = pneg %p65
        %s217 = sand.u32 %s83, 1
        %s218 = scalar_lea.sflag [#allocation3], %s217
        %s219 = sand.u32 %s83, 1
        %s220 = smul.addr %s219, 8
        %s221 = scalar_lea.vmem [#allocation7], %s220
        %p222 = pneg %p96
        %p223 = pneg %p93
        %p224 = pneg %p124
        %p225 = pneg %p121
        %s226 = smul.u32 2, %s24
        %p227 = scmp.lt.s32.totalorder %s23, 1
        %s228 = scalar_select %p227, %s23, 1
        %p229 = scmp.lt.s32.totalorder %s226, 1
        %s230 = scalar_select %p229, %s226, 1
        %s231 = smul.addr %s228, 2
        %s232 = sadd.s32 %s230, %s231
        %s233 = smul.addr %s232, 4
        %s234 = scalar_lea.vmem %s3, %s233
        %s235 = smul.u32 2, %s24
        %s236 = smul.u32 2, %s24
        %p237 = scmp.lt.s32.totalorder %s23, 1
        %s238 = scalar_select %p237, %s23, 1
        %p239 = scmp.lt.s32.totalorder %s236, 1
        %s240 = scalar_select %p239, %s236, 1
        %s241 = smul.addr %s238, 2
        %s242 = sadd.s32 %s240, %s241
        %s243 = smul.addr %s242, 4
        %s244 = scalar_lea.vmem %s3, %s243
        %s245 = smul.u32 2, %s24
        %s246 = sld [smem:[#allocation2]]
        %s247 = sld [smem:[#allocation2 + $0x1]]
        %s248 = sld [smem:[#allocation2 + $0x2]]
        %s249 = sld [smem:[#allocation2 + $0x3]]
        %s250 = sld [smem:[#allocation2 + $0x4]]
        %s251 = sld [smem:[#allocation2 + $0x5]]
        %s252 = sld [smem:[#allocation2 + $0x6]]
        %s253 = sld [smem:[#allocation2 + $0x7]]
        %s254 = sld [smem:[#allocation2 + $0x8]]
        %s255 = sld [smem:[#allocation2 + $0x9]]
        %s256 = sld [smem:[#allocation2 + $0xa]]
        %s257 = sld [smem:[#allocation2 + $0xb]]
        %s258 = sld [smem:[#allocation5]]
        %s259 = sld [smem:[#allocation5 + $0x1]]
        %s260 = sld [smem:[#allocation5 + $0x2]]
        %v261 = vld [vmem:[%s206] ss:$4 sm:$0x3]
        %v262 = vstv %s246
        %v263 = vmul.f32 %v261, %v262
        %v264 = vstv %s258
        %v265 = vadd.f32 %v263, %v264
        %s266 = scalar_lea.vmem %s206, 1 [#allocation7]
        %v267 = vld [vmem:[%s266] ss:$4 sm:$0x3]
        %v268 = vstv %s247
        %v269 = vmul.f32 %v267, %v268
        %v270 = vadd.f32 %v265, %v269
        %s271 = scalar_lea.vmem %s206, 2 [#allocation7]
        %v272 = vld [vmem:[%s271] ss:$4 sm:$0x3]
        %v273 = vstv %s248
        %v274 = vmul.f32 %v272, %v273
        %v275 = vadd.f32 %v270, %v274
        %s276 = scalar_lea.vmem %s206, 3 [#allocation7]
        %v277 = vld [vmem:[%s276] ss:$4 sm:$0x3]
        %v278 = vstv %s249
        %v279 = vmul.f32 %v277, %v278
        %v280 = vadd.f32 %v275, %v279
        %v281 = vlaneseq
        %vm282 = vcmp.ge.s32.totalorder %v281, 0
        %vm283 = vcmp.lt.s32.totalorder %v281, 256
        %vm284 = vmand %vm282, %vm283
        %285 = vst.msk [vmem:[%s244] ss:$4 sm:$0x3] %vm284, %v280
        %v286 = vld [vmem:[%s206] ss:$4 sm:$0x3]
        %v287 = vstv %s250
        %v288 = vmul.f32 %v286, %v287
        %v289 = vstv %s259
        %v290 = vadd.f32 %v288, %v289
        %v291 = vld [vmem:[%s266] ss:$4 sm:$0x3]
        %v292 = vstv %s251
        %v293 = vmul.f32 %v291, %v292
        %v294 = vadd.f32 %v290, %v293
        %v295 = vld [vmem:[%s271] ss:$4 sm:$0x3]
        %v296 = vstv %s252
        %v297 = vmul.f32 %v295, %v296
        %v298 = vadd.f32 %v294, %v297
        %v299 = vld [vmem:[%s276] ss:$4 sm:$0x3]
        %v300 = vstv %s253
        %v301 = vmul.f32 %v299, %v300
        %v302 = vadd.f32 %v298, %v301
        %s303 = scalar_lea.vmem %s244, 1
        %304 = vst.msk [vmem:[%s303] ss:$4 sm:$0x3] %vm284, %v302
        %v305 = vld [vmem:[%s206] ss:$4 sm:$0x3]
        %v306 = vstv %s254
        %v307 = vmul.f32 %v305, %v306
        %v308 = vstv %s260
        %v309 = vadd.f32 %v307, %v308
        %v310 = vld [vmem:[%s266] ss:$4 sm:$0x3]
        %v311 = vstv %s255
        %v312 = vmul.f32 %v310, %v311
        %v313 = vadd.f32 %v309, %v312
        %v314 = vld [vmem:[%s271] ss:$4 sm:$0x3]
        %v315 = vstv %s256
        %v316 = vmul.f32 %v314, %v315
        %v317 = vadd.f32 %v313, %v316
        %v318 = vld [vmem:[%s276] ss:$4 sm:$0x3]
        %v319 = vstv %s257
        %v320 = vmul.f32 %v318, %v319
        %v321 = vadd.f32 %v317, %v320
        %s322 = scalar_lea.vmem %s244, 2
        %323 = vst.msk [vmem:[%s322] ss:$4 sm:$0x3] %vm284, %v321
        %s324 = smul.u32 2, %s24
        %p325 = scmp.lt.s32.totalorder %s23, 1
        %s326 = scalar_select %p325, %s23, 1
        %p327 = scmp.lt.s32.totalorder %s324, 1
        %s328 = scalar_select %p327, %s324, 1
        %s329 = smul.addr %s326, 2
        %s330 = sadd.s32 %s328, %s329
        %s331 = smul.addr %s330, 4
        %s332 = scalar_lea.vmem %s3, %s331
        // Predicated region
        $region45: #{tpu_custom_call.1} parent=31 // pred_check
          %p333 = pneg %p121
        $region46: #{tpu_custom_call.1} parent=31 // pred_check_branch
          %335 = sbr.rel (%p333) target = $region48
        $region47: #{tpu_custom_call.1} parent=31 // pred_region
          %s336 = smul.u32 2, %s24
        $region48: #{tpu_custom_call.1} parent=31 // pred_fallthru
          _
      $region32: #{tpu_custom_call.1} parent=5 // pred_fallthru
        _
      %p337 = scmp.le.s32.totalorder 2, %s14
      // Predicated region
      $region49: #{tpu_custom_call.1} parent=5 // pred_check
        %p338 = pneg %p337
      $region50: #{tpu_custom_call.1} parent=5 // pred_check_branch
        %340 = sbr.rel (%p338) target = $region52
      $region51: #{tpu_custom_call.1} parent=5 // pred_region
        %s341 = ssub.s32 %s14, 2
        // Predicated region
        $region53: #{tpu_custom_call.1} parent=51 // pred_check
          %p342 = pneg %p127
        $region54: #{tpu_custom_call.1} parent=51 // pred_check_branch
          %344 = sbr.rel (%p342) target = $region56
        $region55: #{tpu_custom_call.1} parent=51 // pred_region
          %s345 = smul.u32 2, %s26
          %p346 = scmp.lt.s32.totalorder %s25, 1
          %s347 = scalar_select %p346, %s25, 1
          %p348 = scmp.lt.s32.totalorder %s345, 1
          %s349 = scalar_select %p348, %s345, 1
          %s350 = smul.addr %s347, 2
          %s351 = sadd.s32 %s349, %s350
          %s352 = smul.addr %s351, 4
          %s353 = scalar_lea.vmem %s3, %s352
        $region56: #{tpu_custom_call.1} parent=51 // pred_fallthru
          _
      $region52: #{tpu_custom_call.1} parent=5 // pred_fallthru
        _
    $region6: #{tpu_custom_call.1} parent=1 // loop_footer
      %s18 = sadd.s32 1, %s14
    $region7: #{tpu_custom_call.1} parent=1 // loop_footer_branch
      %13 = sbr.rel target = $region3
    $region8: #{tpu_custom_call.1} parent=1 // loop_exit
      _
    %354 = vsyncpa [#allocation3], 1
    %s355 = scalar_lea.sflag [#allocation3], 1
    %356 = vsyncpa %s355, 1
    %357 = vsyncpa [#allocation4], 1
    %s358 = scalar_lea.sflag [#allocation4], 1
    %359 = vsyncpa %s358, 1
    %360 = vsyncpa [#allocation6], 1

</llo_original>
